<compile_context>
chip_gen: v5e
topology: v5e:2x2
jax: 0.10.0
libtpu: 0.0.40
codegen_flags: <defaults>
</compile_context>

<pallas_src>
import math
import numpy as np

import jax
import jax.numpy as jnp
from jax import lax
from jax.experimental import pallas as pl
from jax.experimental.pallas import tpu as pltpu


# ----------------------------------------------------------------------------
# Pallas kernel: fused BCNet forward for one batch element.
# ----------------------------------------------------------------------------
def bcnet_kernel(v_ref, q_ref, wv_ref, bv_ref, wq_ref, bq_ref,
                 hmat_ref, hbias_ref, o_ref):
    # v_ref:    (1, V, v_dim)   one batch element of image features
    # q_ref:    (1, Q, q_dim)   one batch element of question features
    # wv_ref:   (v_dim, K)      v_net effective weight (weight_norm folded, transposed)
    # bv_ref:   (1, K)          v_net bias
    # wq_ref:   (q_dim, K)      q_net effective weight
    # bq_ref:   (1, K)          q_net bias
    # hmat_ref: (h_out, K)      bilinear interaction weights
    # hbias_ref:(h_out, 1)      bilinear bias
    # o_ref:    (1, h_out, V, Q)
    h_out = o_ref.shape[1]

    # FCNet: weight-normed Linear + ReLU (dropout = identity in eval mode).
    v_ = jnp.maximum(
        jnp.dot(v_ref[0], wv_ref[...], preferred_element_type=jnp.float32)
        + bv_ref[...], 0.0)                                            # (V, K)
    q_ = jnp.maximum(
        jnp.dot(q_ref[0], wq_ref[...], preferred_element_type=jnp.float32)
        + bq_ref[...], 0.0)                                            # (Q, K)

    hmat = hmat_ref[...]      # (h_out, K)
    hbias = hbias_ref[...]    # (h_out, 1)

    # logits[h, i, j] = sum_k hmat[h,k] * v_[i,k] * q_[j,k] + hbias[h]
    # Small static h_out -> fully unrolled loop of clean 2-D MXU contractions.
    for h in range(h_out):
        vh = v_ * hmat[h:h + 1, :]                                     # (V, K)
        logit_h = lax.dot_general(
            vh, q_,
            dimension_numbers=(((1,), (1,)), ((), ())),                # contract K with K
            preferred_element_type=jnp.float32)                        # (V, Q)
        o_ref[0, h] = (logit_h + hbias[h:h + 1]).astype(o_ref.dtype)


# ----------------------------------------------------------------------------
# Wrapper: one pallas_call over the batch grid.
# ----------------------------------------------------------------------------
def bcnet_forward(v, q, wv, bv, wq, bq, h_mat, h_bias):
    """v: (B,V,v_dim), q: (B,Q,q_dim); weights already weight_norm-folded & transposed."""
    B, V, v_dim = v.shape
    _, Q, q_dim = q.shape
    K = wv.shape[1]
    h_out = h_mat.shape[0]

    bv2 = bv.reshape(1, K).astype(jnp.float32)
    bq2 = bq.reshape(1, K).astype(jnp.float32)
    hbias2 = h_bias.reshape(h_out, 1).astype(jnp.float32)

    return pl.pallas_call(
        bcnet_kernel,
        out_shape=jax.ShapeDtypeStruct((B, h_out, V, Q), jnp.float32),
        grid_spec=pltpu.PrefetchScalarGridSpec(
            num_scalar_prefetch=0,
            grid=(B,),
            in_specs=[
                pl.BlockSpec((1, V, v_dim), lambda b: (b, 0, 0)),
                pl.BlockSpec((1, Q, q_dim), lambda b: (b, 0, 0)),
                pl.BlockSpec((v_dim, K), lambda b: (0, 0)),
                pl.BlockSpec((1, K), lambda b: (0, 0)),
                pl.BlockSpec((q_dim, K), lambda b: (0, 0)),
                pl.BlockSpec((1, K), lambda b: (0, 0)),
                pl.BlockSpec((h_out, K), lambda b: (0, 0)),
                pl.BlockSpec((h_out, 1), lambda b: (0, 0)),
            ],
            out_specs=pl.BlockSpec((1, h_out, V, Q), lambda b: (b, 0, 0, 0)),
        ),
        compiler_params=pltpu.CompilerParams(
            dimension_semantics=("parallel",)),   # batch items independent (v7x megacore)
    )(v.astype(jnp.float32), q.astype(jnp.float32),
      wv.astype(jnp.float32), bv2, wq.astype(jnp.float32), bq2,
      h_mat.astype(jnp.float32), hbias2)


# ----------------------------------------------------------------------------
# Parameter construction (PyTorch-style init, weight_norm(dim=None) folded).
# ----------------------------------------------------------------------------
def make_fcnet_params(key, in_dim, out_dim):
    """weight_norm(Linear(in_dim, out_dim), dim=None): W_eff = g * W_v / ||W_v||_F.
    Returns (W_eff^T of shape (in_dim, out_dim), bias of shape (out_dim,))."""
    k1, k2, k3 = jax.random.split(key, 3)
    bound = 1.0 / math.sqrt(in_dim)
    w_v = jax.random.uniform(k1, (out_dim, in_dim), jnp.float32, -bound, bound)
    bias = jax.random.uniform(k2, (out_dim,), jnp.float32, -bound, bound)
    # g initialized to ||W_v||_F in PyTorch; perturb so folding is actually exercised.
    g = jnp.linalg.norm(w_v) * (1.0 + 0.1 * jax.random.normal(k3, ()))
    w_eff = (g / jnp.linalg.norm(w_v)) * w_v           # (out_dim, in_dim)
    return jnp.transpose(w_eff), bias                  # (in_dim, out_dim), (out_dim,)


# ----------------------------------------------------------------------------
# Pure-JAX reference (numerical verification only)
# ----------------------------------------------------------------------------
def bcnet_ref(v, q, wv, bv, wq, bq, h_mat, h_bias):
    v_ = jax.nn.relu(jnp.einsum('bvd,dk->bvk', v, wv) + bv)
    q_ = jax.nn.relu(jnp.einsum('bqd,dk->bqk', q, wq) + bq)
    logits = jnp.einsum('hk,bvk,bqk->bhvq', h_mat, v_, q_)
    return logits + h_bias[None, :, None, None]


if __name__ == "__main__":
    # BCNet hyper-params (small, h_out <= c=32 -> bilinear h_mat branch)
    v_dim, q_dim, h_dim, h_out, k = 32, 32, 32, 4, 3
    K = h_dim * k
    B, V, Q = 2, 16, 8

    key = jax.random.PRNGKey(0)
    kv, kq, kpv, kpq, kh, khb = jax.random.split(key, 6)

    v = jax.random.normal(kv, (B, V, v_dim), jnp.float32)
    q = jax.random.normal(kq, (B, Q, q_dim), jnp.float32)

    wv, bv = make_fcnet_params(kpv, v_dim, K)
    wq, bq = make_fcnet_params(kpq, q_dim, K)
    # nn.Parameter(torch.Tensor(1, h_out, 1, K).normal_()) / (1, h_out, 1, 1).normal_()
    h_mat = jax.random.normal(kh, (h_out, K), jnp.float32)
    h_bias = jax.random.normal(khb, (h_out,), jnp.float32)

    out = bcnet_forward(v, q, wv, bv, wq, bq, h_mat, h_bias)
    out = jax.block_until_ready(out)
    assert out.shape == (B, h_out, V, Q)

    ref = bcnet_ref(v, q, wv, bv, wq, bq, h_mat, h_bias)
    np.testing.assert_allclose(np.asarray(out), np.asarray(ref), atol=1e-4, rtol=1e-4)

    print("KERNEL_OK")
</pallas_src>

<mosaic_0001>
module attributes {stable_mosaic.version = 11 : i64} {
  func.func @bcnet_kernel(%arg0: i32, %arg1: memref<1x16x32xf32, #tpu.memory_space<vmem>>, %arg2: memref<1x8x32xf32, #tpu.memory_space<vmem>>, %arg3: memref<32x96xf32, #tpu.memory_space<vmem>>, %arg4: memref<1x96xf32, #tpu.memory_space<vmem>>, %arg5: memref<32x96xf32, #tpu.memory_space<vmem>>, %arg6: memref<1x96xf32, #tpu.memory_space<vmem>>, %arg7: memref<4x96xf32, #tpu.memory_space<vmem>>, %arg8: memref<4x1xf32, #tpu.memory_space<vmem>>, %arg9: memref<1x4x16x8xf32, #tpu.memory_space<vmem>>) attributes {dimension_semantics = [#tpu.dimension_semantics<parallel>], iteration_bounds = array<i64: 2>, scalar_prefetch = 0 : i64, scratch_operands = 0 : i64, tpu.core_type = #tpu.core_type<tc>, window_params = [{transform_indices = @transform_0, window_bounds = array<i64: 1, 16, 32>}, {transform_indices = @transform_1, window_bounds = array<i64: 1, 8, 32>}, {pipeline_mode = #tpu.pipeline_mode<synchronous>, transform_indices = @transform_2, window_bounds = array<i64: 32, 96>}, {pipeline_mode = #tpu.pipeline_mode<synchronous>, transform_indices = @transform_3, window_bounds = array<i64: 1, 96>}, {pipeline_mode = #tpu.pipeline_mode<synchronous>, transform_indices = @transform_4, window_bounds = array<i64: 32, 96>}, {pipeline_mode = #tpu.pipeline_mode<synchronous>, transform_indices = @transform_5, window_bounds = array<i64: 1, 96>}, {pipeline_mode = #tpu.pipeline_mode<synchronous>, transform_indices = @transform_6, window_bounds = array<i64: 4, 96>}, {pipeline_mode = #tpu.pipeline_mode<synchronous>, transform_indices = @transform_7, window_bounds = array<i64: 4, 1>}, {transform_indices = @transform_8, window_bounds = array<i64: 1, 4, 16, 8>}]} {
    %c0 = arith.constant 0 : index
    %c0_0 = arith.constant 0 : index
    %c0_1 = arith.constant 0 : index
    %0 = vector.load %arg1[%c0, %c0_0, %c0_1] : memref<1x16x32xf32, #tpu.memory_space<vmem>>, vector<1x16x32xf32>
    %1 = vector.shape_cast %0 : vector<1x16x32xf32> to vector<16x32xf32>
    %c0_2 = arith.constant 0 : index
    %c0_3 = arith.constant 0 : index
    %2 = vector.load %arg3[%c0_2, %c0_3] : memref<32x96xf32, #tpu.memory_space<vmem>>, vector<32x96xf32>
    %cst = arith.constant dense<0.000000e+00> : vector<16x96xf32>
    %3 = tpu.matmul %1, %2, %cst {dimension_numbers = #tpu.dot_dimension_numbers<[1], [0], [0], [1], [0, 0, 1, 1], [], []>} : vector<16x32xf32>, vector<32x96xf32>, vector<16x96xf32> -> vector<16x96xf32>
    %c0_4 = arith.constant 0 : index
    %c0_5 = arith.constant 0 : index
    %4 = vector.load %arg4[%c0_4, %c0_5] : memref<1x96xf32, #tpu.memory_space<vmem>>, vector<1x96xf32>
    %5 = vector.broadcast %4 : vector<1x96xf32> to vector<16x96xf32>
    %6 = arith.addf %3, %5 : vector<16x96xf32>
    %cst_6 = arith.constant 0.000000e+00 : f32
    %7 = vector.broadcast %cst_6 : f32 to vector<16x96xf32>
    %8 = arith.maximumf %6, %7 : vector<16x96xf32>
    %c0_7 = arith.constant 0 : index
    %c0_8 = arith.constant 0 : index
    %c0_9 = arith.constant 0 : index
    %9 = vector.load %arg2[%c0_7, %c0_8, %c0_9] : memref<1x8x32xf32, #tpu.memory_space<vmem>>, vector<1x8x32xf32>
    %10 = vector.shape_cast %9 : vector<1x8x32xf32> to vector<8x32xf32>
    %c0_10 = arith.constant 0 : index
    %c0_11 = arith.constant 0 : index
    %11 = vector.load %arg5[%c0_10, %c0_11] : memref<32x96xf32, #tpu.memory_space<vmem>>, vector<32x96xf32>
    %cst_12 = arith.constant dense<0.000000e+00> : vector<8x96xf32>
    %12 = tpu.matmul %10, %11, %cst_12 {dimension_numbers = #tpu.dot_dimension_numbers<[1], [0], [0], [1], [0, 0, 1, 1], [], []>} : vector<8x32xf32>, vector<32x96xf32>, vector<8x96xf32> -> vector<8x96xf32>
    %c0_13 = arith.constant 0 : index
    %c0_14 = arith.constant 0 : index
    %13 = vector.load %arg6[%c0_13, %c0_14] : memref<1x96xf32, #tpu.memory_space<vmem>>, vector<1x96xf32>
    %14 = vector.broadcast %13 : vector<1x96xf32> to vector<8x96xf32>
    %15 = arith.addf %12, %14 : vector<8x96xf32>
    %cst_15 = arith.constant 0.000000e+00 : f32
    %16 = vector.broadcast %cst_15 : f32 to vector<8x96xf32>
    %17 = arith.maximumf %15, %16 : vector<8x96xf32>
    %c0_16 = arith.constant 0 : index
    %c0_17 = arith.constant 0 : index
    %18 = vector.load %arg7[%c0_16, %c0_17] : memref<4x96xf32, #tpu.memory_space<vmem>>, vector<4x96xf32>
    %c0_18 = arith.constant 0 : index
    %c0_19 = arith.constant 0 : index
    %19 = vector.load %arg8[%c0_18, %c0_19] : memref<4x1xf32, #tpu.memory_space<vmem>>, vector<4x1xf32>
    %20 = vector.extract_strided_slice %18 {offsets = [0, 0], sizes = [1, 96], strides = [1, 1]} : vector<4x96xf32> to vector<1x96xf32>
    %21 = vector.broadcast %20 : vector<1x96xf32> to vector<16x96xf32>
    %22 = arith.mulf %8, %21 : vector<16x96xf32>
    %cst_20 = arith.constant dense<0.000000e+00> : vector<16x8xf32>
    %23 = tpu.matmul %22, %17, %cst_20 {dimension_numbers = #tpu.dot_dimension_numbers<[1], [1], [0], [0], [0, 0, 1, 0], [], []>} : vector<16x96xf32>, vector<8x96xf32>, vector<16x8xf32> -> vector<16x8xf32>
    %24 = vector.extract_strided_slice %19 {offsets = [0, 0], sizes = [1, 1], strides = [1, 1]} : vector<4x1xf32> to vector<1x1xf32>
    %25 = vector.broadcast %24 : vector<1x1xf32> to vector<16x8xf32>
    %26 = arith.addf %23, %25 : vector<16x8xf32>
    %c0_21 = arith.constant 0 : index
    %c0_22 = arith.constant 0 : index
    %c0_23 = arith.constant 0 : index
    %c0_24 = arith.constant 0 : index
    %27 = vector.load %arg9[%c0_21, %c0_22, %c0_23, %c0_24] : memref<1x4x16x8xf32, #tpu.memory_space<vmem>>, vector<1x1x16x8xf32>
    %28 = vector.shape_cast %27 : vector<1x1x16x8xf32> to vector<16x8xf32>
    %29 = vector.shape_cast %26 : vector<16x8xf32> to vector<1x1x16x8xf32>
    tpu.vector_store %arg9[%c0_21, %c0_22, %c0_23, %c0_24], %29 {strides = array<i32>} : memref<1x4x16x8xf32, #tpu.memory_space<vmem>>, vector<1x1x16x8xf32>,
    %30 = vector.extract_strided_slice %18 {offsets = [1, 0], sizes = [1, 96], strides = [1, 1]} : vector<4x96xf32> to vector<1x96xf32>
    %31 = vector.broadcast %30 : vector<1x96xf32> to vector<16x96xf32>
    %32 = arith.mulf %8, %31 : vector<16x96xf32>
    %cst_25 = arith.constant dense<0.000000e+00> : vector<16x8xf32>
    %33 = tpu.matmul %32, %17, %cst_25 {dimension_numbers = #tpu.dot_dimension_numbers<[1], [1], [0], [0], [0, 0, 1, 0], [], []>} : vector<16x96xf32>, vector<8x96xf32>, vector<16x8xf32> -> vector<16x8xf32>
    %34 = vector.extract_strided_slice %19 {offsets = [1, 0], sizes = [1, 1], strides = [1, 1]} : vector<4x1xf32> to vector<1x1xf32>
    %35 = vector.broadcast %34 : vector<1x1xf32> to vector<16x8xf32>
    %36 = arith.addf %33, %35 : vector<16x8xf32>
    %c0_26 = arith.constant 0 : index
    %c1 = arith.constant 1 : index
    %c0_27 = arith.constant 0 : index
    %c0_28 = arith.constant 0 : index
    %37 = vector.load %arg9[%c0_26, %c1, %c0_27, %c0_28] : memref<1x4x16x8xf32, #tpu.memory_space<vmem>>, vector<1x1x16x8xf32>
    %38 = vector.shape_cast %37 : vector<1x1x16x8xf32> to vector<16x8xf32>
    %39 = vector.shape_cast %36 : vector<16x8xf32> to vector<1x1x16x8xf32>
    tpu.vector_store %arg9[%c0_26, %c1, %c0_27, %c0_28], %39 {strides = array<i32>} : memref<1x4x16x8xf32, #tpu.memory_space<vmem>>, vector<1x1x16x8xf32>,
    %40 = vector.extract_strided_slice %18 {offsets = [2, 0], sizes = [1, 96], strides = [1, 1]} : vector<4x96xf32> to vector<1x96xf32>
    %41 = vector.broadcast %40 : vector<1x96xf32> to vector<16x96xf32>
    %42 = arith.mulf %8, %41 : vector<16x96xf32>
    %cst_29 = arith.constant dense<0.000000e+00> : vector<16x8xf32>
    %43 = tpu.matmul %42, %17, %cst_29 {dimension_numbers = #tpu.dot_dimension_numbers<[1], [1], [0], [0], [0, 0, 1, 0], [], []>} : vector<16x96xf32>, vector<8x96xf32>, vector<16x8xf32> -> vector<16x8xf32>
    %44 = vector.extract_strided_slice %19 {offsets = [2, 0], sizes = [1, 1], strides = [1, 1]} : vector<4x1xf32> to vector<1x1xf32>
    %45 = vector.broadcast %44 : vector<1x1xf32> to vector<16x8xf32>
    %46 = arith.addf %43, %45 : vector<16x8xf32>
    %c0_30 = arith.constant 0 : index
    %c2 = arith.constant 2 : index
    %c0_31 = arith.constant 0 : index
    %c0_32 = arith.constant 0 : index
    %47 = vector.load %arg9[%c0_30, %c2, %c0_31, %c0_32] : memref<1x4x16x8xf32, #tpu.memory_space<vmem>>, vector<1x1x16x8xf32>
    %48 = vector.shape_cast %47 : vector<1x1x16x8xf32> to vector<16x8xf32>
    %49 = vector.shape_cast %46 : vector<16x8xf32> to vector<1x1x16x8xf32>
    tpu.vector_store %arg9[%c0_30, %c2, %c0_31, %c0_32], %49 {strides = array<i32>} : memref<1x4x16x8xf32, #tpu.memory_space<vmem>>, vector<1x1x16x8xf32>,
    %50 = vector.extract_strided_slice %18 {offsets = [3, 0], sizes = [1, 96], strides = [1, 1]} : vector<4x96xf32> to vector<1x96xf32>
    %51 = vector.broadcast %50 : vector<1x96xf32> to vector<16x96xf32>
    %52 = arith.mulf %8, %51 : vector<16x96xf32>
    %cst_33 = arith.constant dense<0.000000e+00> : vector<16x8xf32>
    %53 = tpu.matmul %52, %17, %cst_33 {dimension_numbers = #tpu.dot_dimension_numbers<[1], [1], [0], [0], [0, 0, 1, 0], [], []>} : vector<16x96xf32>, vector<8x96xf32>, vector<16x8xf32> -> vector<16x8xf32>
    %54 = vector.extract_strided_slice %19 {offsets = [3, 0], sizes = [1, 1], strides = [1, 1]} : vector<4x1xf32> to vector<1x1xf32>
    %55 = vector.broadcast %54 : vector<1x1xf32> to vector<16x8xf32>
    %56 = arith.addf %53, %55 : vector<16x8xf32>
    %c0_34 = arith.constant 0 : index
    %c3 = arith.constant 3 : index
    %c0_35 = arith.constant 0 : index
    %c0_36 = arith.constant 0 : index
    %57 = vector.load %arg9[%c0_34, %c3, %c0_35, %c0_36] : memref<1x4x16x8xf32, #tpu.memory_space<vmem>>, vector<1x1x16x8xf32>
    %58 = vector.shape_cast %57 : vector<1x1x16x8xf32> to vector<16x8xf32>
    %59 = vector.shape_cast %56 : vector<16x8xf32> to vector<1x1x16x8xf32>
    tpu.vector_store %arg9[%c0_34, %c3, %c0_35, %c0_36], %59 {strides = array<i32>} : memref<1x4x16x8xf32, #tpu.memory_space<vmem>>, vector<1x1x16x8xf32>,
    return
  }
  func.func @transform_0(%arg0: i32) -> (i32, i32, i32) {
    %c0_i32 = arith.constant 0 : i32
    %c0_i32_0 = arith.constant 0 : i32
    %c0_i32_1 = arith.constant 0 : i32
    return %arg0, %c0_i32, %c0_i32_0 : i32, i32, i32
  }
  func.func @transform_1(%arg0: i32) -> (i32, i32, i32) {
    %c0_i32 = arith.constant 0 : i32
    %c0_i32_0 = arith.constant 0 : i32
    %c0_i32_1 = arith.constant 0 : i32
    return %arg0, %c0_i32, %c0_i32_0 : i32, i32, i32
  }
  func.func @transform_2(%arg0: i32) -> (i32, i32) {
    %c0_i32 = arith.constant 0 : i32
    %c0_i32_0 = arith.constant 0 : i32
    %c0_i32_1 = arith.constant 0 : i32
    return %c0_i32, %c0_i32_0 : i32, i32
  }
  func.func @transform_3(%arg0: i32) -> (i32, i32) {
    %c0_i32 = arith.constant 0 : i32
    %c0_i32_0 = arith.constant 0 : i32
    %c0_i32_1 = arith.constant 0 : i32
    return %c0_i32, %c0_i32_0 : i32, i32
  }
  func.func @transform_4(%arg0: i32) -> (i32, i32) {
    %c0_i32 = arith.constant 0 : i32
    %c0_i32_0 = arith.constant 0 : i32
    %c0_i32_1 = arith.constant 0 : i32
    return %c0_i32, %c0_i32_0 : i32, i32
  }
  func.func @transform_5(%arg0: i32) -> (i32, i32) {
    %c0_i32 = arith.constant 0 : i32
    %c0_i32_0 = arith.constant 0 : i32
    %c0_i32_1 = arith.constant 0 : i32
    return %c0_i32, %c0_i32_0 : i32, i32
  }
  func.func @transform_6(%arg0: i32) -> (i32, i32) {
    %c0_i32 = arith.constant 0 : i32
    %c0_i32_0 = arith.constant 0 : i32
    %c0_i32_1 = arith.constant 0 : i32
    return %c0_i32, %c0_i32_0 : i32, i32
  }
  func.func @transform_7(%arg0: i32) -> (i32, i32) {
    %c0_i32 = arith.constant 0 : i32
    %c0_i32_0 = arith.constant 0 : i32
    %c0_i32_1 = arith.constant 0 : i32
    return %c0_i32, %c0_i32_0 : i32, i32
  }
  func.func @transform_8(%arg0: i32) -> (i32, i32, i32, i32) {
    %c0_i32 = arith.constant 0 : i32
    %c0_i32_0 = arith.constant 0 : i32
    %c0_i32_1 = arith.constant 0 : i32
    %c0_i32_2 = arith.constant 0 : i32
    return %arg0, %c0_i32, %c0_i32_0, %c0_i32_1 : i32, i32, i32, i32
  }
}

</mosaic_0001>

<llo_original>
// kernel: tpu_custom_call.1
$region0: #{tpu_custom_call.1}
  #allocation0 [shape = 'u32[]', space=smem, size = 0x4, offset = 0x4, fixed_abs, tag = 'smem constant byte address 0x4 - core index']
  #allocation1 [shape = 'u32[72,128]{1,0:T(1,128)}', space=vmem, size = 0x9000, scoped, tag = 'internal scratch']
  %s0 = inlined_call_operand.hbm [shape: f32[2,16,32], index: 0, kind: input, shape index: {}]
  %s1 = inlined_call_operand.hbm [shape: f32[2,8,32], index: 1, kind: input, shape index: {}]
  %s2 = inlined_call_operand.hbm [shape: f32[32,96], index: 2, kind: input, shape index: {}]
  %s3 = inlined_call_operand.vmem [shape: f32[1,96], index: 3, kind: input, shape index: {}]
  %s4 = inlined_call_operand.hbm [shape: f32[32,96], index: 4, kind: input, shape index: {}]
  %s5 = inlined_call_operand.vmem [shape: f32[1,96], index: 5, kind: input, shape index: {}]
  %s6 = inlined_call_operand.vmem [shape: f32[4,96], index: 6, kind: input, shape index: {}]
  %s7 = inlined_call_operand.vmem [shape: f32[4,1], index: 7, kind: input, shape index: {}]
  %s8 = inlined_call_operand.vmem [shape: f32[2,4,16,8], index: 8, kind: output, shape index: {}]
  %s9 = sld [smem:[#allocation0]]
  $region81: #{tpu_custom_call.1} parent=0
    _
  %s11 = ssub.s32 1, %s9
  %s12 = scalar_select 0, %s11, %s9
  $region1: #{tpu_custom_call.1} parent=0
    #allocation2 [shape = 'u8[16384]{0}', space=vmem, size = 0x4000, scoped, tag = 'input window, operand 0']
    #allocation3 [shape = 's32[2]{0}', space=sflag, size = 0x8, scoped, tag = 'scoped memory for tpu_custom_call.1']
    #allocation4 [shape = 'u8[8192]{0}', space=vmem, size = 0x2000, scoped, tag = 'input window, operand 1']
    #allocation5 [shape = 's32[2]{0}', space=sflag, size = 0x8, scoped, tag = 'scoped memory for tpu_custom_call.1']
    #allocation6 [shape = 'u8[16384]{0}', space=vmem, size = 0x4000, scoped, tag = 'input window, operand 2, single buffered']
    #allocation7 [shape = 'u8[16384]{0}', space=vmem, size = 0x4000, scoped, tag = 'input window, operand 4, single buffered']
    #allocation8 [shape = 's32[1]{0}', space=sflag, size = 0x4, scoped, tag = 'scoped memory for tpu_custom_call.1']
    %13 = vsyncpa [#allocation3], 0
    %s14 = scalar_lea.sflag [#allocation3], 1
    %15 = vsyncpa %s14, 0
    %16 = vsyncpa [#allocation5], 0
    %s17 = scalar_lea.sflag [#allocation5], 1
    %18 = vsyncpa %s17, 0
    %19 = vsyncpa [#allocation8], 0
    loop: start=0, step=1, limit=4
    $region2: #{tpu_custom_call.1} parent=1 // loop_pre_header
      _
    $region3: #{tpu_custom_call.1} parent=1 // loop_header
      %s21 = sphi 0, %s25
      %p22 = scmp.ge.s32.totalorder %s21, 4
      %s31 = sphi 0, %s33
      %s34 = sphi 0, %s31
      %s35 = sphi 0, %s34
      %s51 = sphi 0, %s35
      %s57 = sphi 0, %s59
      %s60 = sphi 0, %s57
      %s61 = sphi 0, %s60
      %s77 = sphi 0, %s61
      %s81 = sphi 0, %s81
      %s83 = sphi 0, %s81
      %s84 = sphi 0, %s83
      %s98 = sphi 0, %s84
      %s102 = sphi 0, %s102
      %s104 = sphi 0, %s102
      %s105 = sphi 0, %s104
      %s119 = sphi 0, %s105
      %s123 = sphi 0, %s123
      %s125 = sphi 0, %s123
      %s126 = sphi 0, %s125
      %s140 = sphi 0, %s126
      %s144 = sphi 0, %s144
      %s146 = sphi 0, %s144
      %s147 = sphi 0, %s146
      %s161 = sphi 0, %s147
      %s165 = sphi 0, %s165
      %s167 = sphi 0, %s165
      %s168 = sphi 0, %s167
      %s182 = sphi 0, %s168
      %s186 = sphi 0, %s186
      %s188 = sphi 0, %s186
      %s189 = sphi 0, %s188
      %s203 = sphi 0, %s189
      %s209 = sphi 0, %s211
      %s212 = sphi 0, %s209
      %s213 = sphi 0, %s212
      %s229 = sphi 0, %s213
    $region4: #{tpu_custom_call.1} parent=1 // loop_header_branch
      %24 = sbr.rel (%p22) target = $region8
    $region5: #{tpu_custom_call.1} parent=1 // loop_body
      %s26 = ssub.s32 %s21, 1
      %s27 = ssub.s32 %s21, 2
      %s28 = sadd.s32 %s21, 1
      %s29 = ssub.s32 %s21, %s28
      %p30 = scmp.eq.s32.totalorder %s29, 0
      %s32 = sadd.s32 %s31, 1
      %s33 = scalar_select %p30, %s31, %s32
      %p36 = pneg %p30
      %p37 = scmp.eq.s32.totalorder %s21, 1
      %p38 = por %p36, %p37
      %p39 = scmp.ne.s32.totalorder %s31, %s34
      %p40 = scmp.eq.s32.totalorder %s21, 0
      %p41 = por %p39, %p40
      %p42 = scmp.ne.s32.totalorder %s31, %s34
      %p43 = scmp.eq.s32.totalorder %s26, 1
      %p44 = por %p42, %p43
      %p45 = scmp.ne.s32.totalorder %s34, %s35
      %p46 = scmp.eq.s32.totalorder %s26, 0
      %p47 = por %p45, %p46
      %p48 = scmp.ne.s32.totalorder %s34, %s35
      %p49 = scmp.eq.s32.totalorder %s27, 1
      %p50 = por %p48, %p49
      %p52 = scmp.ne.s32.totalorder %s35, %s51
      %p53 = scmp.eq.s32.totalorder %s27, 0
      %p54 = por %p52, %p53
      %s55 = ssub.s32 %s21, %s28
      %p56 = scmp.eq.s32.totalorder %s55, 0
      %s58 = sadd.s32 %s57, 1
      %s59 = scalar_select %p56, %s57, %s58
      %p62 = pneg %p56
      %p63 = scmp.eq.s32.totalorder %s21, 1
      %p64 = por %p62, %p63
      %p65 = scmp.ne.s32.totalorder %s57, %s60
      %p66 = scmp.eq.s32.totalorder %s21, 0
      %p67 = por %p65, %p66
      %p68 = scmp.ne.s32.totalorder %s57, %s60
      %p69 = scmp.eq.s32.totalorder %s26, 1
      %p70 = por %p68, %p69
      %p71 = scmp.ne.s32.totalorder %s60, %s61
      %p72 = scmp.eq.s32.totalorder %s26, 0
      %p73 = por %p71, %p72
      %p74 = scmp.ne.s32.totalorder %s60, %s61
      %p75 = scmp.eq.s32.totalorder %s27, 1
      %p76 = por %p74, %p75
      %p78 = scmp.ne.s32.totalorder %s61, %s77
      %p79 = scmp.eq.s32.totalorder %s27, 0
      %p80 = por %p78, %p79
      %s82 = sadd.s32 %s81, 1
      %p85 = scmp.eq.s32.totalorder %s21, 1
      %p86 = scmp.ne.s32.totalorder %s81, %s83
      %p87 = scmp.eq.s32.totalorder %s21, 0
      %p88 = por %p86, %p87
      %p89 = scmp.ne.s32.totalorder %s81, %s83
      %p90 = scmp.eq.s32.totalorder %s26, 1
      %p91 = por %p89, %p90
      %p92 = scmp.ne.s32.totalorder %s83, %s84
      %p93 = scmp.eq.s32.totalorder %s26, 0
      %p94 = por %p92, %p93
      %p95 = scmp.ne.s32.totalorder %s83, %s84
      %p96 = scmp.eq.s32.totalorder %s27, 1
      %p97 = por %p95, %p96
      %p99 = scmp.ne.s32.totalorder %s84, %s98
      %p100 = scmp.eq.s32.totalorder %s27, 0
      %p101 = por %p99, %p100
      %s103 = sadd.s32 %s102, 1
      %p106 = scmp.eq.s32.totalorder %s21, 1
      %p107 = scmp.ne.s32.totalorder %s102, %s104
      %p108 = scmp.eq.s32.totalorder %s21, 0
      %p109 = por %p107, %p108
      %p110 = scmp.ne.s32.totalorder %s102, %s104
      %p111 = scmp.eq.s32.totalorder %s26, 1
      %p112 = por %p110, %p111
      %p113 = scmp.ne.s32.totalorder %s104, %s105
      %p114 = scmp.eq.s32.totalorder %s26, 0
      %p115 = por %p113, %p114
      %p116 = scmp.ne.s32.totalorder %s104, %s105
      %p117 = scmp.eq.s32.totalorder %s27, 1
      %p118 = por %p116, %p117
      %p120 = scmp.ne.s32.totalorder %s105, %s119
      %p121 = scmp.eq.s32.totalorder %s27, 0
      %p122 = por %p120, %p121
      %s124 = sadd.s32 %s123, 1
      %p127 = scmp.eq.s32.totalorder %s21, 1
      %p128 = scmp.ne.s32.totalorder %s123, %s125
      %p129 = scmp.eq.s32.totalorder %s21, 0
      %p130 = por %p128, %p129
      %p131 = scmp.ne.s32.totalorder %s123, %s125
      %p132 = scmp.eq.s32.totalorder %s26, 1
      %p133 = por %p131, %p132
      %p134 = scmp.ne.s32.totalorder %s125, %s126
      %p135 = scmp.eq.s32.totalorder %s26, 0
      %p136 = por %p134, %p135
      %p137 = scmp.ne.s32.totalorder %s125, %s126
      %p138 = scmp.eq.s32.totalorder %s27, 1
      %p139 = por %p137, %p138
      %p141 = scmp.ne.s32.totalorder %s126, %s140
      %p142 = scmp.eq.s32.totalorder %s27, 0
      %p143 = por %p141, %p142
      %s145 = sadd.s32 %s144, 1
      %p148 = scmp.eq.s32.totalorder %s21, 1
      %p149 = scmp.ne.s32.totalorder %s144, %s146
      %p150 = scmp.eq.s32.totalorder %s21, 0
      %p151 = por %p149, %p150
      %p152 = scmp.ne.s32.totalorder %s144, %s146
      %p153 = scmp.eq.s32.totalorder %s26, 1
      %p154 = por %p152, %p153
      %p155 = scmp.ne.s32.totalorder %s146, %s147
      %p156 = scmp.eq.s32.totalorder %s26, 0
      %p157 = por %p155, %p156
      %p158 = scmp.ne.s32.totalorder %s146, %s147
      %p159 = scmp.eq.s32.totalorder %s27, 1
      %p160 = por %p158, %p159
      %p162 = scmp.ne.s32.totalorder %s147, %s161
      %p163 = scmp.eq.s32.totalorder %s27, 0
      %p164 = por %p162, %p163
      %s166 = sadd.s32 %s165, 1
      %p169 = scmp.eq.s32.totalorder %s21, 1
      %p170 = scmp.ne.s32.totalorder %s165, %s167
      %p171 = scmp.eq.s32.totalorder %s21, 0
      %p172 = por %p170, %p171
      %p173 = scmp.ne.s32.totalorder %s165, %s167
      %p174 = scmp.eq.s32.totalorder %s26, 1
      %p175 = por %p173, %p174
      %p176 = scmp.ne.s32.totalorder %s167, %s168
      %p177 = scmp.eq.s32.totalorder %s26, 0
      %p178 = por %p176, %p177
      %p179 = scmp.ne.s32.totalorder %s167, %s168
      %p180 = scmp.eq.s32.totalorder %s27, 1
      %p181 = por %p179, %p180
      %p183 = scmp.ne.s32.totalorder %s168, %s182
      %p184 = scmp.eq.s32.totalorder %s27, 0
      %p185 = por %p183, %p184
      %s187 = sadd.s32 %s186, 1
      %p190 = scmp.eq.s32.totalorder %s21, 1
      %p191 = scmp.ne.s32.totalorder %s186, %s188
      %p192 = scmp.eq.s32.totalorder %s21, 0
      %p193 = por %p191, %p192
      %p194 = scmp.ne.s32.totalorder %s186, %s188
      %p195 = scmp.eq.s32.totalorder %s26, 1
      %p196 = por %p194, %p195
      %p197 = scmp.ne.s32.totalorder %s188, %s189
      %p198 = scmp.eq.s32.totalorder %s26, 0
      %p199 = por %p197, %p198
      %p200 = scmp.ne.s32.totalorder %s188, %s189
      %p201 = scmp.eq.s32.totalorder %s27, 1
      %p202 = por %p200, %p201
      %p204 = scmp.ne.s32.totalorder %s189, %s203
      %p205 = scmp.eq.s32.totalorder %s27, 0
      %p206 = por %p204, %p205
      %s207 = ssub.s32 %s21, %s28
      %p208 = scmp.eq.s32.totalorder %s207, 0
      %s210 = sadd.s32 %s209, 1
      %s211 = scalar_select %p208, %s209, %s210
      %p214 = pneg %p208
      %p215 = scmp.eq.s32.totalorder %s21, 1
      %p216 = por %p214, %p215
      %p217 = scmp.ne.s32.totalorder %s209, %s212
      %p218 = scmp.eq.s32.totalorder %s21, 0
      %p219 = por %p217, %p218
      %p220 = scmp.ne.s32.totalorder %s209, %s212
      %p221 = scmp.eq.s32.totalorder %s26, 1
      %p222 = por %p220, %p221
      %p223 = scmp.ne.s32.totalorder %s212, %s213
      %p224 = scmp.eq.s32.totalorder %s26, 0
      %p225 = por %p223, %p224
      %p226 = scmp.ne.s32.totalorder %s212, %s213
      %p227 = scmp.eq.s32.totalorder %s27, 1
      %p228 = por %p226, %p227
      %p230 = scmp.ne.s32.totalorder %s213, %s229
      %p231 = scmp.eq.s32.totalorder %s27, 0
      %p232 = por %p230, %p231
      %p233 = scmp.le.s32.totalorder 1, %s21
      %p234 = scmp.lt.s32.totalorder %s21, 3
      %p235 = pnand %p233, %p234
      %p236 = pneg %p235
      // Predicated region
      $region9: #{tpu_custom_call.1} parent=5 // pred_check
        _
      $region10: #{tpu_custom_call.1} parent=5 // pred_check_branch
        %238 = sbr.rel (%p235) target = $region12
      $region11: #{tpu_custom_call.1} parent=5 // pred_region
        %s239 = ssub.s32 %s21, 1
        // Predicated region
        $region13: #{tpu_custom_call.1} parent=11 // pred_check
          %p240 = pneg %p94
        $region14: #{tpu_custom_call.1} parent=11 // pred_check_branch
          %242 = sbr.rel (%p240) target = $region16
        $region15: #{tpu_custom_call.1} parent=11 // pred_region
          %244 = vsyncadd [#allocation5], 0
          %s245 = sshll.u32 %s2, 4
          %s246 = int_to_ptr.hbm [resolvable:$true] %s245
          %s247 = sshll.u32 [#allocation6], 4
          %s248 = int_to_ptr.vmem [resolvable:$true] %s247
          %253 = dma.hbm_to_vmem [thread:$0]  %s246, 512, %s248, [#allocation5], 128, 128, 8
        $region16: #{tpu_custom_call.1} parent=11 // pred_fallthru
          _
        // Predicated region
        $region17: #{tpu_custom_call.1} parent=11 // pred_check
          %p254 = pneg %p115
        $region18: #{tpu_custom_call.1} parent=11 // pred_check_branch
          %256 = sbr.rel (%p254) target = $region20
        $region19: #{tpu_custom_call.1} parent=11 // pred_region
          _
        $region20: #{tpu_custom_call.1} parent=11 // pred_fallthru
          _
        // Predicated region
        $region21: #{tpu_custom_call.1} parent=11 // pred_check
          %p257 = pneg %p136
        $region22: #{tpu_custom_call.1} parent=11 // pred_check_branch
          %259 = sbr.rel (%p257) target = $region24
        $region23: #{tpu_custom_call.1} parent=11 // pred_region
          %261 = vsyncadd [#allocation8], 0
          %s262 = sshll.u32 %s4, 4
          %s263 = int_to_ptr.hbm [resolvable:$true] %s262
          %s264 = sshll.u32 [#allocation7], 4
          %s265 = int_to_ptr.vmem [resolvable:$true] %s264
          %270 = dma.hbm_to_vmem [thread:$0]  %s263, 512, %s265, [#allocation8], 128, 128, 8
        $region24: #{tpu_custom_call.1} parent=11 // pred_fallthru
          _
        // Predicated region
        $region25: #{tpu_custom_call.1} parent=11 // pred_check
          %p271 = pneg %p157
        $region26: #{tpu_custom_call.1} parent=11 // pred_check_branch
          %273 = sbr.rel (%p271) target = $region28
        $region27: #{tpu_custom_call.1} parent=11 // pred_region
          _
        $region28: #{tpu_custom_call.1} parent=11 // pred_fallthru
          _
        // Predicated region
        $region29: #{tpu_custom_call.1} parent=11 // pred_check
          %p274 = pneg %p178
        $region30: #{tpu_custom_call.1} parent=11 // pred_check_branch
          %276 = sbr.rel (%p274) target = $region32
        $region31: #{tpu_custom_call.1} parent=11 // pred_region
          _
        $region32: #{tpu_custom_call.1} parent=11 // pred_fallthru
          _
        // Predicated region
        $region33: #{tpu_custom_call.1} parent=11 // pred_check
          %p277 = pneg %p199
        $region34: #{tpu_custom_call.1} parent=11 // pred_check_branch
          %279 = sbr.rel (%p277) target = $region36
        $region35: #{tpu_custom_call.1} parent=11 // pred_region
          _
        $region36: #{tpu_custom_call.1} parent=11 // pred_fallthru
          _
      $region12: #{tpu_custom_call.1} parent=5 // pred_fallthru
        _
      %p280 = scmp.lt.s32.totalorder %s21, 2
      // Predicated region
      $region37: #{tpu_custom_call.1} parent=5 // pred_check
        %p281 = pneg %p280
      $region38: #{tpu_custom_call.1} parent=5 // pred_check_branch
        %283 = sbr.rel (%p281) target = $region40
      $region39: #{tpu_custom_call.1} parent=5 // pred_region
        // Predicated region
        $region41: #{tpu_custom_call.1} parent=39 // pred_check
          %p284 = pneg %p41
        $region42: #{tpu_custom_call.1} parent=39 // pred_check_branch
          %286 = sbr.rel (%p284) target = $region44
        $region43: #{tpu_custom_call.1} parent=39 // pred_region
          %s287 = sand.u32 %s31, 1
          %s288 = scalar_lea.sflag [#allocation3], %s287
          %s289 = sand.u32 %s31, 1
          %s290 = smul.addr %s289, 16
          %s291 = scalar_lea.vmem [#allocation2], %s290
          %293 = vsyncadd %s288, 0
          %s294 = smul.addr %s21, 2
          %s295 = smul.addr %s294, 8
          %s296 = scalar_lea.hbm %s0, %s295
          %s297 = sshll.u32 %s296, 4
          %s298 = int_to_ptr.hbm [resolvable:$true] %s297
          %s299 = sshll.u32 %s291, 4
          %s300 = int_to_ptr.vmem [resolvable:$true] %s299
          %305 = dma.hbm_to_vmem [thread:$0]  %s298, 256, %s300, %s288, 128, 128, 8
        $region44: #{tpu_custom_call.1} parent=39 // pred_fallthru
          _
        // Predicated region
        $region45: #{tpu_custom_call.1} parent=39 // pred_check
          %p306 = pneg %p67
        $region46: #{tpu_custom_call.1} parent=39 // pred_check_branch
          %308 = sbr.rel (%p306) target = $region48
        $region47: #{tpu_custom_call.1} parent=39 // pred_region
          %s309 = sand.u32 %s21, 1
          %s310 = scalar_lea.sflag [#allocation5], %s309
          %s311 = sand.u32 %s57, 1
          %s312 = smul.addr %s311, 8
          %s313 = scalar_lea.vmem [#allocation4], %s312
          %315 = vsyncadd %s310, 0
          %s316 = smul.addr %s21, 8
          %s317 = scalar_lea.hbm %s1, %s316
          %s319 = sshll.u32 %s317, 4
          %s320 = int_to_ptr.hbm [resolvable:$true] %s319
          %s321 = sshll.u32 %s313, 4
          %s322 = int_to_ptr.vmem [resolvable:$true] %s321
          %324 = dma.hbm_to_vmem [thread:$0]  %s320, 128, %s322, %s310
        $region48: #{tpu_custom_call.1} parent=39 // pred_fallthru
          _
      $region40: #{tpu_custom_call.1} parent=5 // pred_fallthru
        _
      %p325 = scmp.le.s32.totalorder 1, %s21
      %p326 = scmp.lt.s32.totalorder %s21, 3
      %p327 = pnand %p325, %p326
      %p328 = pneg %p327
      // Predicated region
      $region49: #{tpu_custom_call.1} parent=5 // pred_check
        _
      $region50: #{tpu_custom_call.1} parent=5 // pred_check_branch
        %330 = sbr.rel (%p327) target = $region52
      $region51: #{tpu_custom_call.1} parent=5 // pred_region
        %s331 = ssub.s32 %s21, 1
        %s332 = sand.u32 %s34, 1
        %s333 = scalar_lea.sflag [#allocation3], %s332
        %s334 = sand.u32 %s34, 1
        %s335 = smul.addr %s334, 16
        %s336 = scalar_lea.vmem [#allocation2], %s335
        // Predicated region
        $region53: #{tpu_custom_call.1} parent=51 // pred_check
          %p337 = pneg %p47
        $region54: #{tpu_custom_call.1} parent=51 // pred_check_branch
          %339 = sbr.rel (%p337) target = $region56
        $region55: #{tpu_custom_call.1} parent=51 // pred_region
          %341 = dma.done %s333, 256
        $region56: #{tpu_custom_call.1} parent=51 // pred_fallthru
          _
        %s342 = sand.u32 %s26, 1
        %s343 = scalar_lea.sflag [#allocation5], %s342
        %s344 = sand.u32 %s60, 1
        %s345 = smul.addr %s344, 8
        %s346 = scalar_lea.vmem [#allocation4], %s345
        // Predicated region
        $region57: #{tpu_custom_call.1} parent=51 // pred_check
          %p347 = pneg %p73
        $region58: #{tpu_custom_call.1} parent=51 // pred_check_branch
          %349 = sbr.rel (%p347) target = $region60
        $region59: #{tpu_custom_call.1} parent=51 // pred_region
          %351 = dma.done %s343, 128
        $region60: #{tpu_custom_call.1} parent=51 // pred_fallthru
          _
        // Predicated region
        $region61: #{tpu_custom_call.1} parent=51 // pred_check
          %p352 = pneg %p94
        $region62: #{tpu_custom_call.1} parent=51 // pred_check_branch
          %354 = sbr.rel (%p352) target = $region64
        $region63: #{tpu_custom_call.1} parent=51 // pred_region
          %356 = dma.done [#allocation5], 512
        $region64: #{tpu_custom_call.1} parent=51 // pred_fallthru
          _
        // Predicated region
        $region65: #{tpu_custom_call.1} parent=51 // pred_check
          %p357 = pneg %p136
        $region66: #{tpu_custom_call.1} parent=51 // pred_check_branch
          %359 = sbr.rel (%p357) target = $region68
        $region67: #{tpu_custom_call.1} parent=51 // pred_region
          %361 = dma.done [#allocation8], 512
        $region68: #{tpu_custom_call.1} parent=51 // pred_fallthru
          _
        %s362 = sand.u32 %s34, 1
        %s363 = scalar_lea.sflag [#allocation3], %s362
        %s364 = sand.u32 %s34, 1
        %s365 = smul.addr %s364, 16
        %s366 = scalar_lea.vmem [#allocation2], %s365
        %p367 = pneg %p47
        %p368 = pneg %p44
        %s369 = sand.u32 %s26, 1
        %s370 = scalar_lea.sflag [#allocation5], %s369
        %s371 = sand.u32 %s60, 1
        %s372 = smul.addr %s371, 8
        %s373 = scalar_lea.vmem [#allocation4], %s372
        %p374 = pneg %p73
        %p375 = pneg %p70
        %p376 = pneg %p94
        %p377 = pneg %p91
        %p378 = pneg %p115
        %p379 = pneg %p112
        %p380 = pneg %p136
        %p381 = pneg %p133
        %p382 = pneg %p157
        %p383 = pneg %p154
        %p384 = pneg %p178
        %p385 = pneg %p175
        %p386 = pneg %p199
        %p387 = pneg %p196
        %p388 = pneg %p225
        %p389 = pneg %p222
        %p390 = scmp.lt.s32.totalorder %s26, 1
        %s391 = scalar_select %p390, %s26, 1
        %s392 = smul.addr %s391, 8
        %s393 = smul.addr %s392, 8
        %s394 = scalar_lea.vmem %s8, %s393
        %p395 = scmp.lt.s32.totalorder %s26, 1
        %s396 = scalar_select %p395, %s26, 1
        %s397 = smul.addr %s396, 8
        %s398 = smul.addr %s397, 8
        %s399 = scalar_lea.vmem %s8, %s398
        %v400 = vld [vmem:[%s336] sm:$0xff]
        %v401 = vld [vmem:[%s336 + $0x8] sm:$0xff]
        %v402 = vld [vmem:[#allocation6] sm:$0xff]
        %v403 = vld [vmem:[#allocation6 + $0x8] sm:$0xff]
        %v404 = vld [vmem:[#allocation6 + $0x10] sm:$0xff]
        %v405 = vld [vmem:[#allocation6 + $0x18] sm:$0xff]
        %v406 = vld [vmem:[%s3] sm:$0x1]
        %v408 = vperm.slane %v406, 0
        %vm410 = vcmask 261120
        %v412 = vsel %vm410, %v400, 0
        %v415 = vsel %vm410, %v401, 0
        %417 = vmatpush.msra.mxu0 0.0
        %418 = vmatpush.msra.mxu0 0.0
        %419 = vmatpush.msra.mxu0 0.0
        %420 = vmatpush.msra.mxu0 0.0
        %421 = vmatpush.msra.mxu0 0.0
        %422 = vmatpush.msra.mxu0 0.0
        %423 = vmatpush.msra.mxu0 0.0
        %424 = vmatpush.msra.mxu0 0.0
        %425 = vmatpush.msra.mxu0 0.0
        %426 = vmatpush.msra.mxu0 0.0
        %427 = vmatpush.msra.mxu0 0.0
        %428 = vmatpush.msra.mxu0 0.0
        %429 = vmatpush.msra.mxu0 %v405
        %430 = vmatpush.msra.mxu0 %v404
        %431 = vmatpush.msra.mxu0 %v403
        %432 = vmatpush.msra.mxu0 %v402
        %433 = vmatmul.f32.gmra.mxu0 %v412
        %v434 = vpop.f32.mrf.mxu0
        %v435 = vadd.f32 %v408, %v434
        %436 = vmatmul.f32.gmra.mxu0 %v415
        %v437 = vpop.f32.mrf.mxu0
        %v438 = vadd.f32 %v408, %v437
        %439 = vdwg.mxu0
        %v440 = vmax.f32 %v435, 0.0
        %v441 = vmax.f32 %v438, 0.0
        %v442 = vld [vmem:[%s346] sm:$0xff]
        %v443 = vld [vmem:[#allocation7] sm:$0xff]
        %v444 = vld [vmem:[#allocation7 + $0x8] sm:$0xff]
        %v445 = vld [vmem:[#allocation7 + $0x10] sm:$0xff]
        %v446 = vld [vmem:[#allocation7 + $0x18] sm:$0xff]
        %v447 = vld [vmem:[%s5] sm:$0x1]
        %v449 = vperm.slane %v447, 0
        %v452 = vsel %vm410, %v442, 0
        %454 = vmatpush.msra.mxu0 0.0
        %455 = vmatpush.msra.mxu0 0.0
        %456 = vmatpush.msra.mxu0 0.0
        %457 = vmatpush.msra.mxu0 0.0
        %458 = vmatpush.msra.mxu0 0.0
        %459 = vmatpush.msra.mxu0 0.0
        %460 = vmatpush.msra.mxu0 0.0
        %461 = vmatpush.msra.mxu0 0.0
        %462 = vmatpush.msra.mxu0 0.0
        %463 = vmatpush.msra.mxu0 0.0
        %464 = vmatpush.msra.mxu0 0.0
        %465 = vmatpush.msra.mxu0 0.0
        %466 = vmatpush.msra.mxu0 %v446
        %467 = vmatpush.msra.mxu0 %v445
        %468 = vmatpush.msra.mxu0 %v444
        %469 = vmatpush.msra.mxu0 %v443
        %470 = vmatmul.f32.gmra.mxu0 %v452
        %v471 = vpop.f32.mrf.mxu0
        %v472 = vadd.f32 %v449, %v471
        %473 = vdwg.mxu0
        %v474 = vmax.f32 %v472, 0.0
        %v475 = vld [vmem:[%s6] sm:$0xf]
        %v476 = vld [vmem:[%s7] sm:$0xf]
        %v477 = vperm.slane %v475, 0
        %v478 = vmul.f32 %v440, %v477
        %v479 = vmul.f32 %v441, %v477
        %s481 = vtos %v476
        %v482 = vstv %s481
        %vm484 = vcmask 785408
        %v486 = vsel %vm484, %v478, 0
        %v489 = vsel %vm484, %v479, 0
        %v492 = vsel %vm484, %v474, 0
        %494 = vmatpush.xpose.msra.mxu0 0.0
        %495 = vmatpush.xpose.msra.mxu0 0.0
        %496 = vmatpush.xpose.msra.mxu0 0.0
        %497 = vmatpush.xpose.msra.mxu0 0.0
        %498 = vmatpush.xpose.msra.mxu0 0.0
        %499 = vmatpush.xpose.msra.mxu0 0.0
        %500 = vmatpush.xpose.msra.mxu0 0.0
        %501 = vmatpush.xpose.msra.mxu0 0.0
        %502 = vmatpush.xpose.msra.mxu0 0.0
        %503 = vmatpush.xpose.msra.mxu0 0.0
        %504 = vmatpush.xpose.msra.mxu0 0.0
        %505 = vmatpush.xpose.msra.mxu0 0.0
        %506 = vmatpush.xpose.msra.mxu0 0.0
        %507 = vmatpush.xpose.msra.mxu0 0.0
        %508 = vmatpush.xpose.msra.mxu0 0.0
        %509 = vmatpush.xpose.msra.mxu0 %v492
        %510 = vmatmul.f32.gmra.mxu0 %v486
        %v511 = vpop.f32.mrf.mxu0
        %v512 = vadd.f32 %v482, %v511
        %513 = vmatmul.f32.gmra.mxu0 %v489
        %v514 = vpop.f32.mrf.mxu0
        %v515 = vadd.f32 %v482, %v514
        %516 = vdwg.mxu0
        %vm517 = vcmask 64512
        %518 = vst.msk [vmem:[%s399] sm:$0xff] %vm517, %v512
        %519 = vst.msk [vmem:[%s399 + $0x8] sm:$0xff] %vm517, %v515
        %v520 = vperm.slane %v475, 1
        %v521 = vmul.f32 %v440, %v520
        %v522 = vmul.f32 %v441, %v520
        %v523 = vrot.slane %v476, 1
        %s524 = vtos %v523
        %v525 = vstv %s524
        %v528 = vsel %vm484, %v521, 0
        %v531 = vsel %vm484, %v522, 0
        %533 = vmatpush.xpose.msra.mxu0 0.0
        %534 = vmatpush.xpose.msra.mxu0 0.0
        %535 = vmatpush.xpose.msra.mxu0 0.0
        %536 = vmatpush.xpose.msra.mxu0 0.0
        %537 = vmatpush.xpose.msra.mxu0 0.0
        %538 = vmatpush.xpose.msra.mxu0 0.0
        %539 = vmatpush.xpose.msra.mxu0 0.0
        %540 = vmatpush.xpose.msra.mxu0 0.0
        %541 = vmatpush.xpose.msra.mxu0 0.0
        %542 = vmatpush.xpose.msra.mxu0 0.0
        %543 = vmatpush.xpose.msra.mxu0 0.0
        %544 = vmatpush.xpose.msra.mxu0 0.0
        %545 = vmatpush.xpose.msra.mxu0 0.0
        %546 = vmatpush.xpose.msra.mxu0 0.0
        %547 = vmatpush.xpose.msra.mxu0 0.0
        %548 = vmatpush.xpose.msra.mxu0 %v492
        %549 = vmatmul.f32.gmra.mxu0 %v528
        %v550 = vpop.f32.mrf.mxu0
        %v551 = vadd.f32 %v525, %v550
        %552 = vmatmul.f32.gmra.mxu0 %v531
        %v553 = vpop.f32.mrf.mxu0
        %v554 = vadd.f32 %v525, %v553
        %555 = vdwg.mxu0
        %s556 = scalar_lea.vmem %s399, 16
        %557 = vst.msk [vmem:[%s556] sm:$0xff] %vm517, %v551
        %558 = vst.msk [vmem:[%s556 + $0x8] sm:$0xff] %vm517, %v554
        %v559 = vperm.slane %v475, 2
        %v560 = vmul.f32 %v440, %v559
        %v561 = vmul.f32 %v441, %v559
        %v562 = vrot.slane %v476, 2
        %s563 = vtos %v562
        %v564 = vstv %s563
        %v567 = vsel %vm484, %v560, 0
        %v570 = vsel %vm484, %v561, 0
        %572 = vmatpush.xpose.msra.mxu0 0.0
        %573 = vmatpush.xpose.msra.mxu0 0.0
        %574 = vmatpush.xpose.msra.mxu0 0.0
        %575 = vmatpush.xpose.msra.mxu0 0.0
        %576 = vmatpush.xpose.msra.mxu0 0.0
        %577 = vmatpush.xpose.msra.mxu0 0.0
        %578 = vmatpush.xpose.msra.mxu0 0.0
        %579 = vmatpush.xpose.msra.mxu0 0.0
        %580 = vmatpush.xpose.msra.mxu0 0.0
        %581 = vmatpush.xpose.msra.mxu0 0.0
        %582 = vmatpush.xpose.msra.mxu0 0.0
        %583 = vmatpush.xpose.msra.mxu0 0.0
        %584 = vmatpush.xpose.msra.mxu0 0.0
        %585 = vmatpush.xpose.msra.mxu0 0.0
        %586 = vmatpush.xpose.msra.mxu0 0.0
        %587 = vmatpush.xpose.msra.mxu0 %v492
        %588 = vmatmul.f32.gmra.mxu0 %v567
        %v589 = vpop.f32.mrf.mxu0
        %v590 = vadd.f32 %v564, %v589
        %591 = vmatmul.f32.gmra.mxu0 %v570
        %v592 = vpop.f32.mrf.mxu0
        %v593 = vadd.f32 %v564, %v592
        %594 = vdwg.mxu0
        %s595 = scalar_lea.vmem %s399, 32
        %596 = vst.msk [vmem:[%s595] sm:$0xff] %vm517, %v590
        %597 = vst.msk [vmem:[%s595 + $0x8] sm:$0xff] %vm517, %v593
        %v598 = vperm.slane %v475, 3
        %v599 = vmul.f32 %v440, %v598
        %v600 = vmul.f32 %v441, %v598
        %v601 = vrot.slane %v476, 3
        %s602 = vtos %v601
        %v603 = vstv %s602
        %v606 = vsel %vm484, %v599, 0
        %v609 = vsel %vm484, %v600, 0
        %611 = vmatpush.xpose.msra.mxu0 0.0
        %612 = vmatpush.xpose.msra.mxu0 0.0
        %613 = vmatpush.xpose.msra.mxu0 0.0
        %614 = vmatpush.xpose.msra.mxu0 0.0
        %615 = vmatpush.xpose.msra.mxu0 0.0
        %616 = vmatpush.xpose.msra.mxu0 0.0
        %617 = vmatpush.xpose.msra.mxu0 0.0
        %618 = vmatpush.xpose.msra.mxu0 0.0
        %619 = vmatpush.xpose.msra.mxu0 0.0
        %620 = vmatpush.xpose.msra.mxu0 0.0
        %621 = vmatpush.xpose.msra.mxu0 0.0
        %622 = vmatpush.xpose.msra.mxu0 0.0
        %623 = vmatpush.xpose.msra.mxu0 0.0
        %624 = vmatpush.xpose.msra.mxu0 0.0
        %625 = vmatpush.xpose.msra.mxu0 0.0
        %626 = vmatpush.xpose.msra.mxu0 %v492
        %627 = vmatmul.f32.gmra.mxu0 %v606
        %v628 = vpop.f32.mrf.mxu0
        %v629 = vadd.f32 %v603, %v628
        %630 = vmatmul.f32.gmra.mxu0 %v609
        %v631 = vpop.f32.mrf.mxu0
        %v632 = vadd.f32 %v603, %v631
        %633 = vdwg.mxu0
        %s634 = scalar_lea.vmem %s399, 48
        %635 = vst.msk [vmem:[%s634] sm:$0xff] %vm517, %v629
        %636 = vst.msk [vmem:[%s634 + $0x8] sm:$0xff] %vm517, %v632
        %p637 = scmp.lt.s32.totalorder %s26, 1
        %s638 = scalar_select %p637, %s26, 1
        %s639 = smul.addr %s638, 8
        %s640 = smul.addr %s639, 8
        %s641 = scalar_lea.vmem %s8, %s640
        // Predicated region
        $region69: #{tpu_custom_call.1} parent=51 // pred_check
          %p642 = pneg %p222
        $region70: #{tpu_custom_call.1} parent=51 // pred_check_branch
          %644 = sbr.rel (%p642) target = $region72
        $region71: #{tpu_custom_call.1} parent=51 // pred_region
          _
        $region72: #{tpu_custom_call.1} parent=51 // pred_fallthru
          _
      $region52: #{tpu_custom_call.1} parent=5 // pred_fallthru
        _
      %p645 = scmp.le.s32.totalorder 2, %s21
      // Predicated region
      $region73: #{tpu_custom_call.1} parent=5 // pred_check
        %p646 = pneg %p645
      $region74: #{tpu_custom_call.1} parent=5 // pred_check_branch
        %648 = sbr.rel (%p646) target = $region76
      $region75: #{tpu_custom_call.1} parent=5 // pred_region
        %s649 = ssub.s32 %s21, 2
        // Predicated region
        $region77: #{tpu_custom_call.1} parent=75 // pred_check
          %p650 = pneg %p228
        $region78: #{tpu_custom_call.1} parent=75 // pred_check_branch
          %652 = sbr.rel (%p650) target = $region80
        $region79: #{tpu_custom_call.1} parent=75 // pred_region
          %p653 = scmp.lt.s32.totalorder %s27, 1
          %s654 = scalar_select %p653, %s27, 1
          %s655 = smul.addr %s654, 8
          %s656 = smul.addr %s655, 8
          %s657 = scalar_lea.vmem %s8, %s656
        $region80: #{tpu_custom_call.1} parent=75 // pred_fallthru
          _
      $region76: #{tpu_custom_call.1} parent=5 // pred_fallthru
        _
    $region6: #{tpu_custom_call.1} parent=1 // loop_footer
      %s25 = sadd.s32 1, %s21
    $region7: #{tpu_custom_call.1} parent=1 // loop_footer_branch
      %20 = sbr.rel target = $region3
    $region8: #{tpu_custom_call.1} parent=1 // loop_exit
      _
    %658 = vsyncpa [#allocation3], 1
    %s659 = scalar_lea.sflag [#allocation3], 1
    %660 = vsyncpa %s659, 1
    %661 = vsyncpa [#allocation5], 1
    %s662 = scalar_lea.sflag [#allocation5], 1
    %663 = vsyncpa %s662, 1
    %664 = vsyncpa [#allocation8], 1

</llo_original>
